<compile_context>
chip_gen: v7x
topology: tpu7x:2x2x1
jax: 0.10.0
libtpu: 0.0.40
codegen_flags: <defaults>
</compile_context>

<pallas_src>
import functools

import jax
import jax.numpy as jnp
from jax.experimental import pallas as pl
from jax.experimental.pallas import tpu as pltpu

_LANE = 128
_SUB = 8
_VMEM_BUDGET = 24 * 1024 * 1024   # bytes for double-buffered blocks + live f32 temporaries
_LIVE_TEMPS = 12                  # ~peak number of live (R,128) f32 intermediates in the kernel


def _loss_kernel(w_ref, x_ref, t_ref, out_ref, *, n_i, n_valid, n_classes, masked):
    """One (batch, half, voxel-block) grid step.

    w_ref:  (C,)          f32 class weights (SMEM, scalar-prefetched)
    x_ref:  (1, C, R, L)  logits block (bf16 or f32; upcast per class slice)
    t_ref:  (1, R, L)     int8/int32 target block
    out_ref:(5, 8, L)     f32 per-(batch, half) partial-sum accumulator rows:
                          [inter, sum_p_fg, sum_t_fg, ce_num, ce_den]
    """
    @pl.when(pl.program_id(2) == 0)
    def _():
        out_ref[...] = jnp.zeros_like(out_ref)

    t = t_ref[0]                                   # (R, L) int8/int32
    r, l = t.shape

    if masked:
        # NOTE: pos is int32; fine for < ~2.1e9 voxels per batch item.
        g = pl.program_id(1) * n_i + pl.program_id(2)      # global voxel-block index
        row = jax.lax.broadcasted_iota(jnp.int32, (r, l), 0)
        lane = jax.lax.broadcasted_iota(jnp.int32, (r, l), 1)
        pos = (g * r + row) * l + lane
        valid = pos < n_valid
        validf = valid.astype(jnp.float32)

    def load_x(k):
        xk = x_ref[0, k].astype(jnp.float32)       # (R, L)
        if masked:
            # mask BEFORE exp/max so over-read / padded logits can never become Inf/NaN
            xk = jnp.where(valid, xk, 0.0)
        return xk

    # ---- pass 1: max over the class axis (leading dim => pure elementwise VPU maxes) ----
    m = load_x(0)
    for k in range(1, n_classes):
        m = jnp.maximum(m, load_x(k))

    # ---- pass 2: fused exp / sum / target-gather (no (C,R,L) temporaries) ----
    sumex = jnp.zeros_like(m)                      # sum_k exp(x_k - m)
    sum_fg = jnp.zeros_like(m)                     # sum_{k>=1} exp(x_k - m)
    x_t = jnp.zeros_like(m)                        # logit at the target class
    e_t = jnp.zeros_like(m)                        # exp(x_t - m)
    w_t = jnp.zeros_like(m)                        # class weight at the target class
    for k in range(n_classes):
        xk = load_x(k)
        ek = jnp.exp(xk - m)                       # EUP
        sumex = sumex + ek
        if k >= 1:
            sum_fg = sum_fg + ek
        eqk = t == k
        x_t = jnp.where(eqk, xk, x_t)
        e_t = jnp.where(eqk, ek, e_t)
        w_t = jnp.where(eqk, w_ref[k], w_t)

    inv = pl.reciprocal(sumex, approx=True)        # EUP (approx ~1e-3 rel err; fine for a loss)
    fg = (t >= 1).astype(jnp.float32)              # foreground (class >= 1) indicator
    if masked:
        fg = fg * validf
        w_t = w_t * validf

    p_t = e_t * inv                                # softmax prob at the target class
    nll = jnp.log(sumex) + (m - x_t)               # exact -log_softmax at the target

    inter_v = p_t * fg                             # dice intersection per voxel
    sump_v = sum_fg * inv                          # sum of foreground probs per voxel
    if masked:
        sump_v = sump_v * validf
    cen_v = w_t * nll                              # weighted CE numerator per voxel

    def red(v):                                    # (R, L) -> (8, L): pure vreg adds (no XLU)
        return jnp.sum(jnp.reshape(v, (r // _SUB, _SUB, l)), axis=0)

    out_ref[0] += red(inter_v)
    out_ref[1] += red(sump_v)
    out_ref[2] += red(fg)
    out_ref[3] += red(cen_v)
    out_ref[4] += red(w_t)


def dice_ce_loss(logits, target, weight, alpha=0.5, block_voxels=262144):
    """logits: (b, C, h, w, s) float32/bfloat16; target: (b, h, w, s) int; weight: (C,) float."""
    b, c, h, w, s = logits.shape
    hws = h * w * s

    x = jnp.reshape(logits, (b, c, hws))                    # free reshape, dtype pass-through
    t = jnp.reshape(target, (b, hws))                       # free reshape

    chunk = _SUB * _LANE                                    # 1024
    hws_pad = pl.cdiv(hws, chunk) * chunk
    H = hws_pad // _LANE                                    # multiple of 8

    # Narrow target dtype in HBM (4x less target DMA). Only when every target block is
    # 32-row aligned (int8 sublane packing); callers should ideally pass int8 upstream.
    t_dtype = jnp.int8 if (c <= 127 and H % 32 == 0) else jnp.int32
    t = t.astype(t_dtype)

    if hws_pad != hws:
        # TODO(synk): rare ragged fallback; this materializes a full copy of the logits.
        # Emit 1024-aligned voxel counts (or pad in the upstream producer) to stay copy-free.
        x = jnp.pad(x, ((0, 0), (0, 0), (0, hws_pad - hws)))
        t = jnp.pad(t, ((0, 0), (0, hws_pad - hws)))

    x = jnp.reshape(x, (b, c, H, _LANE))                    # free reshape
    t = jnp.reshape(t, (b, H, _LANE))                       # free reshape

    logit_bytes = jnp.dtype(x.dtype).itemsize
    t_bytes = jnp.dtype(t_dtype).itemsize

    # ---- choose voxel-block row count R from a VMEM budget (double-buffered + temporaries) ----
    bytes_per_row = 2 * _LANE * (c * logit_bytes + t_bytes) + _LIVE_TEMPS * _LANE * 4
    r_budget = max(32, (_VMEM_BUDGET // bytes_per_row) // 32 * 32)
    r_cap = max(32, (block_voxels // _LANE) // 32 * 32)
    r_max = min(r_budget, r_cap)
    R = H if H <= r_max else r_max
    n_blocks = pl.cdiv(H, R)

    # ---- split the voxel-block range in two "parallel" halves so both v7x TensorCores get
    #      work even when b == 1 (harmless single-TC no-op otherwise). Rebalance R so that no
    #      grid step maps to a block that is fully out of bounds. ----
    n_split, n_i = 1, n_blocks
    if n_blocks >= 2:
        ni2 = pl.cdiv(n_blocks, 2)
        r2 = min(R, max(32, pl.cdiv(pl.cdiv(H, 2 * ni2), 32) * 32))
        if (2 * ni2 - 1) * r2 < H:                          # last block still starts in-bounds
            n_split, n_i, R = 2, ni2, r2

    n_cover = n_split * n_i * R                             # rows covered by the grid
    masked = (n_cover * _LANE != hws)                       # any over-coverage / padding -> mask

    wgt = jnp.asarray(weight, dtype=jnp.float32).reshape(c)

    kernel = functools.partial(_loss_kernel, n_i=n_i, n_valid=hws,
                               n_classes=c, masked=masked)

    cost = pl.CostEstimate(
        flops=int(b * hws * (6 * c + 13)),
        transcendentals=int(b * hws * (c + 2)),
        bytes_accessed=int(b * hws * (c * logit_bytes + t_bytes)
                           + b * n_split * 5 * _SUB * _LANE * 4),
    )

    acc = pl.pallas_call(
        kernel,
        out_shape=jax.ShapeDtypeStruct((b * n_split * 5, _SUB, _LANE), jnp.float32),
        grid_spec=pltpu.PrefetchScalarGridSpec(
            num_scalar_prefetch=1,                          # class weights -> SMEM
            grid=(b, n_split, n_i),
            in_specs=[
                pl.BlockSpec((1, c, R, _LANE),
                             lambda bb, hh, i, wref: (bb, 0, hh * n_i + i, 0)),
                pl.BlockSpec((1, R, _LANE),
                             lambda bb, hh, i, wref: (bb, hh * n_i + i, 0)),
            ],
            out_specs=pl.BlockSpec((5, _SUB, _LANE),
                                   lambda bb, hh, i, wref: (bb * n_split + hh, 0, 0)),
        ),
        compiler_params=pltpu.CompilerParams(
            dimension_semantics=("parallel", "parallel", "arbitrary"),
            vmem_limit_bytes=32 * 1024 * 1024),
        cost_estimate=cost,
    )(wgt, x, t)

    sums = jnp.sum(acc.reshape(b * n_split, 5, _SUB * _LANE), axis=(0, 2))  # tiny XLA epilogue
    inter, sum_p, sum_t, ce_num, ce_den = sums

    smooth = 0.01
    dice = 2.0 * inter / (sum_p + sum_t + smooth)
    ce = ce_num / ce_den
    total = (1.0 - alpha) * ce + (1.0 - dice) * alpha
    return 3.0 * total


def reference_loss(logits, target, weight, alpha=0.5):
    """Pure-JAX mirror of the PyTorch forward, for verification."""
    smooth = 0.01
    b, c = logits.shape[0], logits.shape[1]
    p = jax.nn.softmax(logits.astype(jnp.float32), axis=1)
    oh = jax.nn.one_hot(target, c, axis=1, dtype=jnp.float32)        # (b, C, h, w, s)
    p1 = p[:, 1:].reshape(b, c - 1, -1)
    t1 = oh[:, 1:].reshape(b, c - 1, -1)
    inter = jnp.sum(p1 * t1)
    union = jnp.sum(p1) + jnp.sum(t1) + smooth
    dice = 2.0 * inter / union
    lsm = jax.nn.log_softmax(logits.astype(jnp.float32), axis=1)
    nll = -jnp.take_along_axis(lsm, target[:, None], axis=1)[:, 0]   # (b, h, w, s)
    w_t = weight[target]
    ce = jnp.sum(w_t * nll) / jnp.sum(w_t)
    total = (1.0 - alpha) * ce + (1.0 - dice) * alpha
    return 3.0 * total


if __name__ == "__main__":
    key = jax.random.PRNGKey(0)
    alpha = 0.5
    weight = jnp.array([0.2, 1.0, 1.5, 2.0], dtype=jnp.float32)

    def check(shape, dtype=jnp.float32, **kw):
        b, nc, h, w, s = shape
        k1, k2 = jax.random.split(jax.random.fold_in(key, h * w * s + b))
        logits = jax.random.normal(k1, (b, nc, h, w, s), dtype=jnp.float32).astype(dtype)
        target = jax.random.randint(k2, (b, h, w, s), 0, nc, dtype=jnp.int32)
        out = jax.block_until_ready(dice_ce_loss(logits, target, weight, alpha=alpha, **kw))
        ref = reference_loss(logits, target, weight, alpha=alpha)
        assert jnp.allclose(out, ref, rtol=2e-3, atol=2e-3), (shape, dtype, out, ref)

    # main case: aligned layout, single block per batch, no masking (int32 targets, H=16)
    check((2, 4, 16, 16, 8))
    # bf16 logits pass-through (half the HBM bytes), same path as above
    check((2, 4, 16, 16, 8), dtype=jnp.bfloat16)
    # int8 targets + voxel-range split across two "parallel" halves (b=1, both-TC path)
    check((1, 4, 16, 16, 32), block_voxels=4096)
    # split + masked edge block (H not a multiple of the covered range)
    check((1, 4, 16, 16, 24), block_voxels=4096)
    # ragged voxel count -> pad + in-kernel valid-mask fallback path
    check((2, 4, 8, 8, 9))

    print("KERNEL_OK")
</pallas_src>

<mosaic_0001>
module attributes {stable_mosaic.version = 11 : i64} {
  func.func @_loss_kernel(%arg0: i32, %arg1: i32, %arg2: i32, %arg3: memref<4xf32, #tpu.memory_space<smem>>, %arg4: memref<1x4x16x128xf32, #tpu.memory_space<vmem>>, %arg5: memref<1x16x128xi32, #tpu.memory_space<vmem>>, %arg6: memref<5x8x128xf32, #tpu.memory_space<vmem>>) attributes {dimension_semantics = [#tpu.dimension_semantics<parallel>, #tpu.dimension_semantics<parallel>, #tpu.dimension_semantics<arbitrary>], iteration_bounds = array<i64: 2, 1, 1>, scalar_prefetch = 1 : i64, scratch_operands = 0 : i64, tpu.core_type = #tpu.core_type<tc>, window_params = [{transform_indices = @transform_0, window_bounds = array<i64: 1, 4, 16, 128>}, {transform_indices = @transform_1, window_bounds = array<i64: 1, 16, 128>}, {transform_indices = @transform_2, window_bounds = array<i64: 5, 8, 128>}]} {
    %c0_i32 = arith.constant 0 : i32
    %0 = arith.cmpi eq, %arg2, %c0_i32 : i32
    %1 = arith.extui %0 : i1 to i32
    %c0_i32_0 = arith.constant 0 : i32
    %2 = arith.cmpi ne, %1, %c0_i32_0 : i32
    scf.if %2 {
      %cst_76 = arith.constant 0.000000e+00 : f32
      %124 = vector.broadcast %cst_76 : f32 to vector<5x8x128xf32>
      %c0_77 = arith.constant 0 : index
      %c0_78 = arith.constant 0 : index
      %c0_79 = arith.constant 0 : index
      %125 = vector.load %arg6[%c0_77, %c0_78, %c0_79] : memref<5x8x128xf32, #tpu.memory_space<vmem>>, vector<5x8x128xf32>
      tpu.vector_store %arg6[%c0_77, %c0_78, %c0_79], %124 {strides = array<i32>} : memref<5x8x128xf32, #tpu.memory_space<vmem>>, vector<5x8x128xf32>,
    } else {
    }
    %c0 = arith.constant 0 : index
    %c0_1 = arith.constant 0 : index
    %c0_2 = arith.constant 0 : index
    %3 = vector.load %arg5[%c0, %c0_1, %c0_2] : memref<1x16x128xi32, #tpu.memory_space<vmem>>, vector<1x16x128xi32>
    %4 = vector.shape_cast %3 : vector<1x16x128xi32> to vector<16x128xi32>
    %c0_3 = arith.constant 0 : index
    %c0_4 = arith.constant 0 : index
    %c0_5 = arith.constant 0 : index
    %c0_6 = arith.constant 0 : index
    %5 = vector.load %arg4[%c0_3, %c0_4, %c0_5, %c0_6] : memref<1x4x16x128xf32, #tpu.memory_space<vmem>>, vector<1x1x16x128xf32>
    %6 = vector.shape_cast %5 : vector<1x1x16x128xf32> to vector<16x128xf32>
    %c0_7 = arith.constant 0 : index
    %c1 = arith.constant 1 : index
    %c0_8 = arith.constant 0 : index
    %c0_9 = arith.constant 0 : index
    %7 = vector.load %arg4[%c0_7, %c1, %c0_8, %c0_9] : memref<1x4x16x128xf32, #tpu.memory_space<vmem>>, vector<1x1x16x128xf32>
    %8 = vector.shape_cast %7 : vector<1x1x16x128xf32> to vector<16x128xf32>
    %9 = arith.maximumf %6, %8 : vector<16x128xf32>
    %c0_10 = arith.constant 0 : index
    %c2 = arith.constant 2 : index
    %c0_11 = arith.constant 0 : index
    %c0_12 = arith.constant 0 : index
    %10 = vector.load %arg4[%c0_10, %c2, %c0_11, %c0_12] : memref<1x4x16x128xf32, #tpu.memory_space<vmem>>, vector<1x1x16x128xf32>
    %11 = vector.shape_cast %10 : vector<1x1x16x128xf32> to vector<16x128xf32>
    %12 = arith.maximumf %9, %11 : vector<16x128xf32>
    %c0_13 = arith.constant 0 : index
    %c3 = arith.constant 3 : index
    %c0_14 = arith.constant 0 : index
    %c0_15 = arith.constant 0 : index
    %13 = vector.load %arg4[%c0_13, %c3, %c0_14, %c0_15] : memref<1x4x16x128xf32, #tpu.memory_space<vmem>>, vector<1x1x16x128xf32>
    %14 = vector.shape_cast %13 : vector<1x1x16x128xf32> to vector<16x128xf32>
    %15 = arith.maximumf %12, %14 : vector<16x128xf32>
    %cst = arith.constant 0.000000e+00 : f32
    %16 = vector.broadcast %cst : f32 to vector<16x128xf32>
    %cst_16 = arith.constant 0.000000e+00 : f32
    %17 = vector.broadcast %cst_16 : f32 to vector<16x128xf32>
    %cst_17 = arith.constant 0.000000e+00 : f32
    %18 = vector.broadcast %cst_17 : f32 to vector<16x128xf32>
    %cst_18 = arith.constant 0.000000e+00 : f32
    %19 = vector.broadcast %cst_18 : f32 to vector<16x128xf32>
    %cst_19 = arith.constant 0.000000e+00 : f32
    %20 = vector.broadcast %cst_19 : f32 to vector<16x128xf32>
    %c0_20 = arith.constant 0 : index
    %c0_21 = arith.constant 0 : index
    %c0_22 = arith.constant 0 : index
    %c0_23 = arith.constant 0 : index
    %21 = vector.load %arg4[%c0_20, %c0_21, %c0_22, %c0_23] : memref<1x4x16x128xf32, #tpu.memory_space<vmem>>, vector<1x1x16x128xf32>
    %22 = vector.shape_cast %21 : vector<1x1x16x128xf32> to vector<16x128xf32>
    %23 = arith.subf %22, %15 : vector<16x128xf32>
    %24 = math.exp %23 : vector<16x128xf32>
    %25 = arith.addf %16, %24 : vector<16x128xf32>
    %c0_i32_24 = arith.constant 0 : i32
    %26 = vector.broadcast %c0_i32_24 : i32 to vector<16x128xi32>
    %27 = arith.cmpi eq, %4, %26 : vector<16x128xi32>
    %28 = arith.select %27, %22, %18 : vector<16x128xi1>, vector<16x128xf32>
    %29 = arith.select %27, %24, %19 : vector<16x128xi1>, vector<16x128xf32>
    %c0_25 = arith.constant 0 : index
    %30 = memref.load %arg3[%c0_25] : memref<4xf32, #tpu.memory_space<smem>>
    %31 = vector.broadcast %30 : f32 to vector<16x128xf32>
    %32 = arith.select %27, %31, %20 : vector<16x128xi1>, vector<16x128xf32>
    %c0_26 = arith.constant 0 : index
    %c1_27 = arith.constant 1 : index
    %c0_28 = arith.constant 0 : index
    %c0_29 = arith.constant 0 : index
    %33 = vector.load %arg4[%c0_26, %c1_27, %c0_28, %c0_29] : memref<1x4x16x128xf32, #tpu.memory_space<vmem>>, vector<1x1x16x128xf32>
    %34 = vector.shape_cast %33 : vector<1x1x16x128xf32> to vector<16x128xf32>
    %35 = arith.subf %34, %15 : vector<16x128xf32>
    %36 = math.exp %35 : vector<16x128xf32>
    %37 = arith.addf %25, %36 : vector<16x128xf32>
    %38 = arith.addf %17, %36 : vector<16x128xf32>
    %c1_i32 = arith.constant 1 : i32
    %39 = vector.broadcast %c1_i32 : i32 to vector<16x128xi32>
    %40 = arith.cmpi eq, %4, %39 : vector<16x128xi32>
    %41 = arith.select %40, %34, %28 : vector<16x128xi1>, vector<16x128xf32>
    %42 = arith.select %40, %36, %29 : vector<16x128xi1>, vector<16x128xf32>
    %c1_30 = arith.constant 1 : index
    %43 = memref.load %arg3[%c1_30] : memref<4xf32, #tpu.memory_space<smem>>
    %44 = vector.broadcast %43 : f32 to vector<16x128xf32>
    %45 = arith.select %40, %44, %32 : vector<16x128xi1>, vector<16x128xf32>
    %c0_31 = arith.constant 0 : index
    %c2_32 = arith.constant 2 : index
    %c0_33 = arith.constant 0 : index
    %c0_34 = arith.constant 0 : index
    %46 = vector.load %arg4[%c0_31, %c2_32, %c0_33, %c0_34] : memref<1x4x16x128xf32, #tpu.memory_space<vmem>>, vector<1x1x16x128xf32>
    %47 = vector.shape_cast %46 : vector<1x1x16x128xf32> to vector<16x128xf32>
    %48 = arith.subf %47, %15 : vector<16x128xf32>
    %49 = math.exp %48 : vector<16x128xf32>
    %50 = arith.addf %37, %49 : vector<16x128xf32>
    %51 = arith.addf %38, %49 : vector<16x128xf32>
    %c2_i32 = arith.constant 2 : i32
    %52 = vector.broadcast %c2_i32 : i32 to vector<16x128xi32>
    %53 = arith.cmpi eq, %4, %52 : vector<16x128xi32>
    %54 = arith.select %53, %47, %41 : vector<16x128xi1>, vector<16x128xf32>
    %55 = arith.select %53, %49, %42 : vector<16x128xi1>, vector<16x128xf32>
    %c2_35 = arith.constant 2 : index
    %56 = memref.load %arg3[%c2_35] : memref<4xf32, #tpu.memory_space<smem>>
    %57 = vector.broadcast %56 : f32 to vector<16x128xf32>
    %58 = arith.select %53, %57, %45 : vector<16x128xi1>, vector<16x128xf32>
    %c0_36 = arith.constant 0 : index
    %c3_37 = arith.constant 3 : index
    %c0_38 = arith.constant 0 : index
    %c0_39 = arith.constant 0 : index
    %59 = vector.load %arg4[%c0_36, %c3_37, %c0_38, %c0_39] : memref<1x4x16x128xf32, #tpu.memory_space<vmem>>, vector<1x1x16x128xf32>
    %60 = vector.shape_cast %59 : vector<1x1x16x128xf32> to vector<16x128xf32>
    %61 = arith.subf %60, %15 : vector<16x128xf32>
    %62 = math.exp %61 : vector<16x128xf32>
    %63 = arith.addf %50, %62 : vector<16x128xf32>
    %64 = arith.addf %51, %62 : vector<16x128xf32>
    %c3_i32 = arith.constant 3 : i32
    %65 = vector.broadcast %c3_i32 : i32 to vector<16x128xi32>
    %66 = arith.cmpi eq, %4, %65 : vector<16x128xi32>
    %67 = arith.select %66, %60, %54 : vector<16x128xi1>, vector<16x128xf32>
    %68 = arith.select %66, %62, %55 : vector<16x128xi1>, vector<16x128xf32>
    %c3_40 = arith.constant 3 : index
    %69 = memref.load %arg3[%c3_40] : memref<4xf32, #tpu.memory_space<smem>>
    %70 = vector.broadcast %69 : f32 to vector<16x128xf32>
    %71 = arith.select %66, %70, %58 : vector<16x128xi1>, vector<16x128xf32>
    %72 = tpu.reciprocal %63 {approx = true} : vector<16x128xf32> -> vector<16x128xf32>
    %c1_i32_41 = arith.constant 1 : i32
    %73 = vector.broadcast %c1_i32_41 : i32 to vector<16x128xi32>
    %74 = arith.cmpi sge, %4, %73 : vector<16x128xi32>
    %75 = arith.extui %74 : vector<16x128xi1> to vector<16x128xi32>
    %76 = arith.sitofp %75 : vector<16x128xi32> to vector<16x128xf32>
    %77 = arith.mulf %68, %72 : vector<16x128xf32>
    %78 = math.log %63 : vector<16x128xf32>
    %79 = arith.subf %15, %67 : vector<16x128xf32>
    %80 = arith.addf %78, %79 : vector<16x128xf32>
    %81 = arith.mulf %77, %76 : vector<16x128xf32>
    %82 = arith.mulf %64, %72 : vector<16x128xf32>
    %83 = arith.mulf %71, %80 : vector<16x128xf32>
    %c0_42 = arith.constant 0 : index
    %c0_43 = arith.constant 0 : index
    %c0_44 = arith.constant 0 : index
    %84 = vector.load %arg6[%c0_42, %c0_43, %c0_44] : memref<5x8x128xf32, #tpu.memory_space<vmem>>, vector<1x8x128xf32>
    %85 = vector.shape_cast %84 : vector<1x8x128xf32> to vector<8x128xf32>
    %86 = vector.shape_cast %81 : vector<16x128xf32> to vector<2x8x128xf32>
    %cst_45 = arith.constant dense<0.000000e+00> : vector<8x128xf32>
    %87 = vector.multi_reduction <add>, %86, %cst_45 [0] : vector<2x8x128xf32> to vector<8x128xf32>
    %88 = arith.addf %85, %87 : vector<8x128xf32>
    %c0_46 = arith.constant 0 : index
    %c0_47 = arith.constant 0 : index
    %c0_48 = arith.constant 0 : index
    %89 = vector.load %arg6[%c0_46, %c0_47, %c0_48] : memref<5x8x128xf32, #tpu.memory_space<vmem>>, vector<1x8x128xf32>
    %90 = vector.shape_cast %89 : vector<1x8x128xf32> to vector<8x128xf32>
    %91 = vector.shape_cast %88 : vector<8x128xf32> to vector<1x8x128xf32>
    tpu.vector_store %arg6[%c0_46, %c0_47, %c0_48], %91 {strides = array<i32>} : memref<5x8x128xf32, #tpu.memory_space<vmem>>, vector<1x8x128xf32>,
    %c1_49 = arith.constant 1 : index
    %c0_50 = arith.constant 0 : index
    %c0_51 = arith.constant 0 : index
    %92 = vector.load %arg6[%c1_49, %c0_50, %c0_51] : memref<5x8x128xf32, #tpu.memory_space<vmem>>, vector<1x8x128xf32>
    %93 = vector.shape_cast %92 : vector<1x8x128xf32> to vector<8x128xf32>
    %94 = vector.shape_cast %82 : vector<16x128xf32> to vector<2x8x128xf32>
    %cst_52 = arith.constant dense<0.000000e+00> : vector<8x128xf32>
    %95 = vector.multi_reduction <add>, %94, %cst_52 [0] : vector<2x8x128xf32> to vector<8x128xf32>
    %96 = arith.addf %93, %95 : vector<8x128xf32>
    %c1_53 = arith.constant 1 : index
    %c0_54 = arith.constant 0 : index
    %c0_55 = arith.constant 0 : index
    %97 = vector.load %arg6[%c1_53, %c0_54, %c0_55] : memref<5x8x128xf32, #tpu.memory_space<vmem>>, vector<1x8x128xf32>
    %98 = vector.shape_cast %97 : vector<1x8x128xf32> to vector<8x128xf32>
    %99 = vector.shape_cast %96 : vector<8x128xf32> to vector<1x8x128xf32>
    tpu.vector_store %arg6[%c1_53, %c0_54, %c0_55], %99 {strides = array<i32>} : memref<5x8x128xf32, #tpu.memory_space<vmem>>, vector<1x8x128xf32>,
    %c2_56 = arith.constant 2 : index
    %c0_57 = arith.constant 0 : index
    %c0_58 = arith.constant 0 : index
    %100 = vector.load %arg6[%c2_56, %c0_57, %c0_58] : memref<5x8x128xf32, #tpu.memory_space<vmem>>, vector<1x8x128xf32>
    %101 = vector.shape_cast %100 : vector<1x8x128xf32> to vector<8x128xf32>
    %102 = vector.shape_cast %76 : vector<16x128xf32> to vector<2x8x128xf32>
    %cst_59 = arith.constant dense<0.000000e+00> : vector<8x128xf32>
    %103 = vector.multi_reduction <add>, %102, %cst_59 [0] : vector<2x8x128xf32> to vector<8x128xf32>
    %104 = arith.addf %101, %103 : vector<8x128xf32>
    %c2_60 = arith.constant 2 : index
    %c0_61 = arith.constant 0 : index
    %c0_62 = arith.constant 0 : index
    %105 = vector.load %arg6[%c2_60, %c0_61, %c0_62] : memref<5x8x128xf32, #tpu.memory_space<vmem>>, vector<1x8x128xf32>
    %106 = vector.shape_cast %105 : vector<1x8x128xf32> to vector<8x128xf32>
    %107 = vector.shape_cast %104 : vector<8x128xf32> to vector<1x8x128xf32>
    tpu.vector_store %arg6[%c2_60, %c0_61, %c0_62], %107 {strides = array<i32>} : memref<5x8x128xf32, #tpu.memory_space<vmem>>, vector<1x8x128xf32>,
    %c3_63 = arith.constant 3 : index
    %c0_64 = arith.constant 0 : index
    %c0_65 = arith.constant 0 : index
    %108 = vector.load %arg6[%c3_63, %c0_64, %c0_65] : memref<5x8x128xf32, #tpu.memory_space<vmem>>, vector<1x8x128xf32>
    %109 = vector.shape_cast %108 : vector<1x8x128xf32> to vector<8x128xf32>
    %110 = vector.shape_cast %83 : vector<16x128xf32> to vector<2x8x128xf32>
    %cst_66 = arith.constant dense<0.000000e+00> : vector<8x128xf32>
    %111 = vector.multi_reduction <add>, %110, %cst_66 [0] : vector<2x8x128xf32> to vector<8x128xf32>
    %112 = arith.addf %109, %111 : vector<8x128xf32>
    %c3_67 = arith.constant 3 : index
    %c0_68 = arith.constant 0 : index
    %c0_69 = arith.constant 0 : index
    %113 = vector.load %arg6[%c3_67, %c0_68, %c0_69] : memref<5x8x128xf32, #tpu.memory_space<vmem>>, vector<1x8x128xf32>
    %114 = vector.shape_cast %113 : vector<1x8x128xf32> to vector<8x128xf32>
    %115 = vector.shape_cast %112 : vector<8x128xf32> to vector<1x8x128xf32>
    tpu.vector_store %arg6[%c3_67, %c0_68, %c0_69], %115 {strides = array<i32>} : memref<5x8x128xf32, #tpu.memory_space<vmem>>, vector<1x8x128xf32>,
    %c4 = arith.constant 4 : index
    %c0_70 = arith.constant 0 : index
    %c0_71 = arith.constant 0 : index
    %116 = vector.load %arg6[%c4, %c0_70, %c0_71] : memref<5x8x128xf32, #tpu.memory_space<vmem>>, vector<1x8x128xf32>
    %117 = vector.shape_cast %116 : vector<1x8x128xf32> to vector<8x128xf32>
    %118 = vector.shape_cast %71 : vector<16x128xf32> to vector<2x8x128xf32>
    %cst_72 = arith.constant dense<0.000000e+00> : vector<8x128xf32>
    %119 = vector.multi_reduction <add>, %118, %cst_72 [0] : vector<2x8x128xf32> to vector<8x128xf32>
    %120 = arith.addf %117, %119 : vector<8x128xf32>
    %c4_73 = arith.constant 4 : index
    %c0_74 = arith.constant 0 : index
    %c0_75 = arith.constant 0 : index
    %121 = vector.load %arg6[%c4_73, %c0_74, %c0_75] : memref<5x8x128xf32, #tpu.memory_space<vmem>>, vector<1x8x128xf32>
    %122 = vector.shape_cast %121 : vector<1x8x128xf32> to vector<8x128xf32>
    %123 = vector.shape_cast %120 : vector<8x128xf32> to vector<1x8x128xf32>
    tpu.vector_store %arg6[%c4_73, %c0_74, %c0_75], %123 {strides = array<i32>} : memref<5x8x128xf32, #tpu.memory_space<vmem>>, vector<1x8x128xf32>,
    return
  }
  func.func @transform_0(%arg0: i32, %arg1: i32, %arg2: i32, %arg3: memref<4xf32, #tpu.memory_space<smem>>) -> (i32, i32, i32, i32) {
    %c1_i32 = arith.constant 1 : i32
    %0 = arith.muli %arg1, %c1_i32 : i32
    %1 = arith.addi %0, %arg2 : i32
    %c0_i32 = arith.constant 0 : i32
    %c0_i32_0 = arith.constant 0 : i32
    %c0_i32_1 = arith.constant 0 : i32
    return %arg0, %c0_i32, %1, %c0_i32_0 : i32, i32, i32, i32
  }
  func.func @transform_1(%arg0: i32, %arg1: i32, %arg2: i32, %arg3: memref<4xf32, #tpu.memory_space<smem>>) -> (i32, i32, i32) {
    %c1_i32 = arith.constant 1 : i32
    %0 = arith.muli %arg1, %c1_i32 : i32
    %1 = arith.addi %0, %arg2 : i32
    %c0_i32 = arith.constant 0 : i32
    %c0_i32_0 = arith.constant 0 : i32
    return %arg0, %1, %c0_i32 : i32, i32, i32
  }
  func.func @transform_2(%arg0: i32, %arg1: i32, %arg2: i32, %arg3: memref<4xf32, #tpu.memory_space<smem>>) -> (i32, i32, i32) {
    %c1_i32 = arith.constant 1 : i32
    %0 = arith.muli %arg0, %c1_i32 : i32
    %1 = arith.addi %0, %arg1 : i32
    %c0_i32 = arith.constant 0 : i32
    %c0_i32_0 = arith.constant 0 : i32
    %c0_i32_1 = arith.constant 0 : i32
    return %1, %c0_i32, %c0_i32_0 : i32, i32, i32
  }
}

</mosaic_0001>

<llo_original>
// kernel: tpu_custom_call.1
$region0: #{tpu_custom_call.1}
  #allocation0 [shape = 'u32[]', space=smem, size = 0x4, offset = 0x4, fixed_abs, tag = 'smem constant byte address 0x4 - core index']
  #allocation1 [shape = 'u32[144,128]{1,0:T(1,128)}', space=vmem, size = 0x12000, scoped, tag = 'internal scratch']
  #allocation2 [shape = 's32[1]{0}', space=sflag, size = 0x4, scoped, tag = 'scoped memory for tpu_custom_call.1']
  #allocation3 [shape = 'u8[512]{0}', space=smem, size = 0x200, scoped, tag = 'prefetched SMEM operand 0']
  %s0 = inlined_call_operand.hbm [shape: f32[4], index: 0, kind: input, shape index: {}]
  %s1 = inlined_call_operand.hbm [shape: f32[2,4,16,128], index: 1, kind: input, shape index: {}]
  %s2 = inlined_call_operand.hbm [shape: s32[2,16,128], index: 2, kind: input, shape index: {}]
  %s3 = inlined_call_operand.hbm [shape: f32[10,8,128], index: 3, kind: output, shape index: {}]
  %s4 = sld [smem:[#allocation0]]
  $region53: #{tpu_custom_call.1} parent=0
    _
  %s6 = ssub.s32 1, %s4
  %s7 = scalar_select 0, %s6, %s4
  %9 = dma.hbm_to_smem %s0, 16, [#allocation3], [#allocation2]
  %10 = dma.done [#allocation2], 16
  %11 = sfence
  $region1: #{tpu_custom_call.1} parent=0
    #allocation4 [shape = 'u8[65536]{0}', space=vmem, size = 0x10000, scoped, tag = 'input window, operand 1']
    #allocation5 [shape = 's32[2]{0}', space=sflag, size = 0x8, scoped, tag = 'scoped memory for tpu_custom_call.1']
    #allocation6 [shape = 's32[2]{0}', space=sflag, size = 0x8, scoped, tag = 'scoped memory for tpu_custom_call.1']
    #allocation7 [shape = 'u8[16384]{0}', space=vmem, size = 0x4000, scoped, tag = 'input window, operand 2']
    #allocation8 [shape = 's32[2]{0}', space=sflag, size = 0x8, scoped, tag = 'scoped memory for tpu_custom_call.1']
    #allocation9 [shape = 'u8[40960]{0}', space=vmem, size = 0xa000, scoped, tag = 'output window, operand 0']
    %12 = vsyncpa [#allocation5], 0
    %s13 = scalar_lea.sflag [#allocation5], 1
    %14 = vsyncpa %s13, 0
    %15 = vsyncpa [#allocation8], 0
    %s16 = scalar_lea.sflag [#allocation8], 1
    %17 = vsyncpa %s16, 0
    %18 = vsyncpa [#allocation6], 0
    %s19 = scalar_lea.sflag [#allocation6], 1
    %20 = vsyncpa %s19, 0
    loop: start=0, step=1, limit=4
    $region2: #{tpu_custom_call.1} parent=1 // loop_pre_header
      _
    $region3: #{tpu_custom_call.1} parent=1 // loop_header
      %s22 = sphi 0, %s26
      %p23 = scmp.ge.s32.totalorder %s22, 4
      %s29 = sphi 0, %s48
      %s30 = sphi 0, %s44
      %s31 = sphi 0, %s40
      %s32 = sphi 0, %s29
      %s33 = sphi 0, %s30
      %s34 = sphi 0, %s31
      %s35 = sphi 0, %s32
      %s36 = sphi 0, %s33
      %s37 = sphi 0, %s34
      %s55 = sphi 0, %s57
      %s58 = sphi 0, %s55
      %s59 = sphi 0, %s58
      %s75 = sphi 0, %s59
      %s85 = sphi 0, %s87
      %s88 = sphi 0, %s85
      %s89 = sphi 0, %s88
      %s105 = sphi 0, %s89
      %s113 = sphi 0, %s115
      %s116 = sphi 0, %s113
      %s117 = sphi 0, %s116
      %s133 = sphi 0, %s117
    $region4: #{tpu_custom_call.1} parent=1 // loop_header_branch
      %25 = sbr.rel (%p23) target = $region8
    $region5: #{tpu_custom_call.1} parent=1 // loop_body
      %s27 = ssub.s32 %s22, 1
      %s28 = ssub.s32 %s22, 2
      %s38 = sadd.s32 1, %s31
      %p39 = scmp.ge.s32.totalorder %s38, 1
      %s40 = scalar_select %p39, 0, %s38
      %s41 = sadd.s32 1, %s30
      %s42 = scalar_select %p39, %s41, %s30
      %p43 = scmp.ge.s32.totalorder %s42, 1
      %s44 = scalar_select %p43, 0, %s42
      %s45 = sadd.s32 1, %s29
      %s46 = scalar_select %p43, %s45, %s29
      %p47 = scmp.ge.s32.totalorder %s46, 2
      %s48 = scalar_select %p47, 0, %s46
      %s49 = sadd.s32 %s30, %s31
      %s50 = sadd.s32 %s44, %s40
      %s51 = ssub.s32 %s29, %s48
      %s52 = ssub.s32 %s49, %s50
      %s53 = sor.u32 %s51, %s52
      %p54 = scmp.eq.s32.totalorder %s53, 0
      %s56 = sadd.s32 %s55, 1
      %s57 = scalar_select %p54, %s55, %s56
      %p60 = pneg %p54
      %p61 = scmp.eq.s32.totalorder %s22, 1
      %p62 = por %p60, %p61
      %p63 = scmp.ne.s32.totalorder %s55, %s58
      %p64 = scmp.eq.s32.totalorder %s22, 0
      %p65 = por %p63, %p64
      %p66 = scmp.ne.s32.totalorder %s55, %s58
      %p67 = scmp.eq.s32.totalorder %s27, 1
      %p68 = por %p66, %p67
      %p69 = scmp.ne.s32.totalorder %s58, %s59
      %p70 = scmp.eq.s32.totalorder %s27, 0
      %p71 = por %p69, %p70
      %p72 = scmp.ne.s32.totalorder %s58, %s59
      %p73 = scmp.eq.s32.totalorder %s28, 1
      %p74 = por %p72, %p73
      %p76 = scmp.ne.s32.totalorder %s59, %s75
      %p77 = scmp.eq.s32.totalorder %s28, 0
      %p78 = por %p76, %p77
      %s79 = sadd.s32 %s30, %s31
      %s80 = sadd.s32 %s44, %s40
      %s81 = ssub.s32 %s29, %s48
      %s82 = ssub.s32 %s79, %s80
      %s83 = sor.u32 %s81, %s82
      %p84 = scmp.eq.s32.totalorder %s83, 0
      %s86 = sadd.s32 %s85, 1
      %s87 = scalar_select %p84, %s85, %s86
      %p90 = pneg %p84
      %p91 = scmp.eq.s32.totalorder %s22, 1
      %p92 = por %p90, %p91
      %p93 = scmp.ne.s32.totalorder %s85, %s88
      %p94 = scmp.eq.s32.totalorder %s22, 0
      %p95 = por %p93, %p94
      %p96 = scmp.ne.s32.totalorder %s85, %s88
      %p97 = scmp.eq.s32.totalorder %s27, 1
      %p98 = por %p96, %p97
      %p99 = scmp.ne.s32.totalorder %s88, %s89
      %p100 = scmp.eq.s32.totalorder %s27, 0
      %p101 = por %p99, %p100
      %p102 = scmp.ne.s32.totalorder %s88, %s89
      %p103 = scmp.eq.s32.totalorder %s28, 1
      %p104 = por %p102, %p103
      %p106 = scmp.ne.s32.totalorder %s89, %s105
      %p107 = scmp.eq.s32.totalorder %s28, 0
      %p108 = por %p106, %p107
      %s109 = sadd.s32 %s29, %s30
      %s110 = sadd.s32 %s48, %s44
      %s111 = ssub.s32 %s109, %s110
      %p112 = scmp.eq.s32.totalorder %s111, 0
      %s114 = sadd.s32 %s113, 1
      %s115 = scalar_select %p112, %s113, %s114
      %p118 = pneg %p112
      %p119 = scmp.eq.s32.totalorder %s22, 1
      %p120 = por %p118, %p119
      %p121 = scmp.ne.s32.totalorder %s113, %s116
      %p122 = scmp.eq.s32.totalorder %s22, 0
      %p123 = por %p121, %p122
      %p124 = scmp.ne.s32.totalorder %s113, %s116
      %p125 = scmp.eq.s32.totalorder %s27, 1
      %p126 = por %p124, %p125
      %p127 = scmp.ne.s32.totalorder %s116, %s117
      %p128 = scmp.eq.s32.totalorder %s27, 0
      %p129 = por %p127, %p128
      %p130 = scmp.ne.s32.totalorder %s116, %s117
      %p131 = scmp.eq.s32.totalorder %s28, 1
      %p132 = por %p130, %p131
      %p134 = scmp.ne.s32.totalorder %s117, %s133
      %p135 = scmp.eq.s32.totalorder %s28, 0
      %p136 = por %p134, %p135
      %p137 = scmp.le.s32.totalorder 1, %s22
      %p138 = scmp.lt.s32.totalorder %s22, 3
      %p139 = pnand %p137, %p138
      %p140 = pneg %p139
      // Predicated region
      $region9: #{tpu_custom_call.1} parent=5 // pred_check
        _
      $region10: #{tpu_custom_call.1} parent=5 // pred_check_branch
        %142 = sbr.rel (%p139) target = $region12
      $region11: #{tpu_custom_call.1} parent=5 // pred_region
        %s143 = ssub.s32 %s22, 1
      $region12: #{tpu_custom_call.1} parent=5 // pred_fallthru
        _
      %p144 = scmp.lt.s32.totalorder %s22, 2
      // Predicated region
      $region13: #{tpu_custom_call.1} parent=5 // pred_check
        %p145 = pneg %p144
      $region14: #{tpu_custom_call.1} parent=5 // pred_check_branch
        %147 = sbr.rel (%p145) target = $region16
      $region15: #{tpu_custom_call.1} parent=5 // pred_region
        // Predicated region
        $region17: #{tpu_custom_call.1} parent=15 // pred_check
          %p148 = pneg %p65
        $region18: #{tpu_custom_call.1} parent=15 // pred_check_branch
          %150 = sbr.rel (%p148) target = $region20
        $region19: #{tpu_custom_call.1} parent=15 // pred_region
          %s151 = sand.u32 %s55, 1
          %s152 = scalar_lea.sflag [#allocation5], %s151
          %s153 = sand.u32 %s55, 1
          %s154 = smul.addr %s153, 64
          %s155 = scalar_lea.vmem [#allocation4], %s154
          %s156 = sadd.s32 %s30, %s31
          %s157 = smul.u32 2, %s156
          %s159 = ssub.s32 1024, 1024
          %160 = vsyncadd %s152, %s159
          %s161 = smul.addr %s29, 8
          %s162 = sadd.s32 %s157, %s161
          %s163 = smul.addr %s162, 128
          %s164 = scalar_lea.hbm %s1, %s163
          %s165 = sshll.u32 %s155, 4
          %s166 = int_to_ptr.vmem [resolvable:$true] %s165
          %171 = dma.hbm_to_vmem [thread:$0]  %s164, 1024, %s166, %s152, 128, 128, 8
        $region20: #{tpu_custom_call.1} parent=15 // pred_fallthru
          _
        // Predicated region
        $region21: #{tpu_custom_call.1} parent=15 // pred_check
          %p172 = pneg %p95
        $region22: #{tpu_custom_call.1} parent=15 // pred_check_branch
          %174 = sbr.rel (%p172) target = $region24
        $region23: #{tpu_custom_call.1} parent=15 // pred_region
          %s175 = sand.u32 %s85, 1
          %s176 = scalar_lea.sflag [#allocation8], %s175
          %s177 = sand.u32 %s85, 1
          %s178 = smul.addr %s177, 16
          %s179 = scalar_lea.vmem [#allocation7], %s178
          %s180 = sadd.s32 %s30, %s31
          %s181 = smul.u32 2, %s180
          %s183 = ssub.s32 256, 256
          %184 = vsyncadd %s176, %s183
          %s185 = smul.addr %s29, 2
          %s186 = sadd.s32 %s181, %s185
          %s187 = smul.addr %s186, 128
          %s188 = scalar_lea.hbm %s2, %s187
          %s189 = sshll.u32 %s179, 4
          %s190 = int_to_ptr.vmem [resolvable:$true] %s189
          %195 = dma.hbm_to_vmem [thread:$0]  %s188, 256, %s190, %s176, 128, 128, 8
        $region24: #{tpu_custom_call.1} parent=15 // pred_fallthru
          _
      $region16: #{tpu_custom_call.1} parent=5 // pred_fallthru
        _
      %p196 = scmp.le.s32.totalorder 1, %s22
      %p197 = scmp.lt.s32.totalorder %s22, 3
      %p198 = pnand %p196, %p197
      %p199 = pneg %p198
      // Predicated region
      $region25: #{tpu_custom_call.1} parent=5 // pred_check
        _
      $region26: #{tpu_custom_call.1} parent=5 // pred_check_branch
        %201 = sbr.rel (%p198) target = $region28
      $region27: #{tpu_custom_call.1} parent=5 // pred_region
        %s202 = ssub.s32 %s22, 1
        %s203 = sand.u32 %s58, 1
        %s204 = scalar_lea.sflag [#allocation5], %s203
        %s205 = sand.u32 %s58, 1
        %s206 = smul.addr %s205, 64
        %s207 = scalar_lea.vmem [#allocation4], %s206
        // Predicated region
        $region29: #{tpu_custom_call.1} parent=27 // pred_check
          %p208 = pneg %p71
        $region30: #{tpu_custom_call.1} parent=27 // pred_check_branch
          %210 = sbr.rel (%p208) target = $region32
        $region31: #{tpu_custom_call.1} parent=27 // pred_region
          %211 = dma.done %s204, 1024
        $region32: #{tpu_custom_call.1} parent=27 // pred_fallthru
          _
        %s212 = sand.u32 %s88, 1
        %s213 = scalar_lea.sflag [#allocation8], %s212
        %s214 = sand.u32 %s88, 1
        %s215 = smul.addr %s214, 16
        %s216 = scalar_lea.vmem [#allocation7], %s215
        // Predicated region
        $region33: #{tpu_custom_call.1} parent=27 // pred_check
          %p217 = pneg %p101
        $region34: #{tpu_custom_call.1} parent=27 // pred_check_branch
          %219 = sbr.rel (%p217) target = $region36
        $region35: #{tpu_custom_call.1} parent=27 // pred_region
          %220 = dma.done %s213, 256
        $region36: #{tpu_custom_call.1} parent=27 // pred_fallthru
          _
        %s221 = sand.u32 %s58, 1
        %s222 = scalar_lea.sflag [#allocation5], %s221
        %s223 = sand.u32 %s58, 1
        %s224 = smul.addr %s223, 64
        %s225 = scalar_lea.vmem [#allocation4], %s224
        %p226 = pneg %p71
        %p227 = pneg %p68
        %s228 = sand.u32 %s88, 1
        %s229 = scalar_lea.sflag [#allocation8], %s228
        %s230 = sand.u32 %s88, 1
        %s231 = smul.addr %s230, 16
        %s232 = scalar_lea.vmem [#allocation7], %s231
        %p233 = pneg %p101
        %p234 = pneg %p98
        %p235 = pneg %p129
        %p236 = pneg %p126
        %s237 = sand.u32 %s116, 1
        %s238 = scalar_lea.sflag [#allocation6], %s237
        %s239 = sand.u32 %s116, 1
        %s240 = smul.addr %s239, 40
        %s241 = scalar_lea.vmem [#allocation9], %s240
        %s242 = sadd.s32 %s33, %s34
        %s243 = smul.u32 2, %s242
        %s244 = sadd.s32 %s33, %s34
        %s245 = smul.u32 2, %s244
        %s246 = sadd.s32 %s32, %s33
        %s247 = smul.u32 5, %s246
        %p248 = scmp.eq.s32.totalorder %s34, 0
        // Predicated region
        $region37: #{tpu_custom_call.1} parent=27 // pred_check
          %p249 = pneg %p248
        $region38: #{tpu_custom_call.1} parent=27 // pred_check_branch
          %251 = sbr.rel (%p249) target = $region40
        $region39: #{tpu_custom_call.1} parent=27 // pred_region
          %252 = vst [vmem:[%s241] sm:$0xff] 0.0
          %253 = vst [vmem:[%s241 + $0x8] sm:$0xff] 0.0
          %254 = vst [vmem:[%s241 + $0x10] sm:$0xff] 0.0
          %255 = vst [vmem:[%s241 + $0x18] sm:$0xff] 0.0
          %256 = vst [vmem:[%s241 + $0x20] sm:$0xff] 0.0
        $region40: #{tpu_custom_call.1} parent=27 // pred_fallthru
          _
        %v257 = vld [vmem:[%s216] sm:$0xff]
        %v258 = vld [vmem:[%s216 + $0x8] sm:$0xff]
        %v259 = vld [vmem:[%s207] sm:$0xff]
        %v260 = vld [vmem:[%s207 + $0x8] sm:$0xff]
        %s261 = scalar_lea.vmem %s207, 16 [#allocation4]
        %v262 = vld [vmem:[%s261] sm:$0xff]
        %v263 = vld [vmem:[%s261 + $0x8] sm:$0xff]
        %v264 = vmax.f32 %v259, %v262
        %v265 = vmax.f32 %v260, %v263
        %s266 = scalar_lea.vmem %s207, 32 [#allocation4]
        %v267 = vld [vmem:[%s266] sm:$0xff]
        %v268 = vld [vmem:[%s266 + $0x8] sm:$0xff]
        %v269 = vmax.f32 %v264, %v267
        %v270 = vmax.f32 %v265, %v268
        %s271 = scalar_lea.vmem %s207, 48 [#allocation4]
        %v272 = vld [vmem:[%s271] sm:$0xff]
        %v273 = vld [vmem:[%s271 + $0x8] sm:$0xff]
        %v274 = vmax.f32 %v269, %v272
        %v275 = vmax.f32 %v270, %v273
        %v276 = vsub.f32 %v259, %v274
        %v277 = vsub.f32 %v260, %v275
        %v278 = vmul.f32 %v276, 1.442695
        %v279 = vpow.pop %v278
        %v280 = vmul.f32 %v277, 1.442695
        %v281 = vpow.pop %v280
        %v282 = vadd.f32 %v279, 0.0
        %v283 = vadd.f32 %v281, 0.0
        %vm284 = vcmp.eq.s32.totalorder %v257, 0
        %vm285 = vcmp.eq.s32.totalorder %v258, 0
        %v286 = vsel %vm284, %v259, 0.0
        %v287 = vsel %vm285, %v260, 0.0
        %v288 = vsel %vm284, %v279, 0.0
        %v289 = vsel %vm285, %v281, 0.0
        %s290 = sld [smem:[#allocation3]]
        %v291 = vstv %s290
        %v292 = vsel %vm284, %v291, 0.0
        %v293 = vsel %vm285, %v291, 0.0
        %v294 = vsub.f32 %v262, %v274
        %v295 = vsub.f32 %v263, %v275
        %v296 = vmul.f32 %v294, 1.442695
        %v297 = vpow.pop %v296
        %v298 = vmul.f32 %v295, 1.442695
        %v299 = vpow.pop %v298
        %v300 = vadd.f32 %v282, %v297
        %v301 = vadd.f32 %v283, %v299
        %v302 = vadd.f32 %v297, 0.0
        %v303 = vadd.f32 %v299, 0.0
        %vm304 = vcmp.eq.s32.totalorder %v257, 1
        %vm305 = vcmp.eq.s32.totalorder %v258, 1
        %v306 = vsel %vm304, %v262, %v286
        %v307 = vsel %vm305, %v263, %v287
        %v308 = vsel %vm304, %v297, %v288
        %v309 = vsel %vm305, %v299, %v289
        %s310 = sld [smem:[#allocation3 + $0x1]]
        %v311 = vstv %s310
        %v312 = vsel %vm304, %v311, %v292
        %v313 = vsel %vm305, %v311, %v293
        %v314 = vsub.f32 %v267, %v274
        %v315 = vsub.f32 %v268, %v275
        %v316 = vmul.f32 %v314, 1.442695
        %v317 = vpow.pop %v316
        %v318 = vmul.f32 %v315, 1.442695
        %v319 = vpow.pop %v318
        %v320 = vadd.f32 %v300, %v317
        %v321 = vadd.f32 %v301, %v319
        %v322 = vadd.f32 %v302, %v317
        %v323 = vadd.f32 %v303, %v319
        %vm324 = vcmp.eq.s32.totalorder %v257, 2
        %vm325 = vcmp.eq.s32.totalorder %v258, 2
        %v326 = vsel %vm324, %v267, %v306
        %v327 = vsel %vm325, %v268, %v307
        %v328 = vsel %vm324, %v317, %v308
        %v329 = vsel %vm325, %v319, %v309
        %s330 = sld [smem:[#allocation3 + $0x2]]
        %v331 = vstv %s330
        %v332 = vsel %vm324, %v331, %v312
        %v333 = vsel %vm325, %v331, %v313
        %v334 = vsub.f32 %v272, %v274
        %v335 = vsub.f32 %v273, %v275
        %v336 = vmul.f32 %v334, 1.442695
        %v337 = vpow.pop %v336
        %v338 = vmul.f32 %v335, 1.442695
        %v339 = vpow.pop %v338
        %v340 = vadd.f32 %v320, %v337
        %v341 = vadd.f32 %v321, %v339
        %v342 = vadd.f32 %v322, %v337
        %v343 = vadd.f32 %v323, %v339
        %vm344 = vcmp.eq.s32.totalorder %v257, 3
        %vm345 = vcmp.eq.s32.totalorder %v258, 3
        %v346 = vsel %vm344, %v272, %v326
        %v347 = vsel %vm345, %v273, %v327
        %v348 = vsel %vm344, %v337, %v328
        %v349 = vsel %vm345, %v339, %v329
        %s350 = sld [smem:[#allocation3 + $0x3]]
        %v351 = vstv %s350
        %v352 = vsel %vm344, %v351, %v332
        %v353 = vsel %vm345, %v351, %v333
        %v354 = vrcp.pop %v340
        %v355 = vrcp.pop %v341
        %vm356 = vcmp.ge.s32.totalorder %v257, 1
        %vm357 = vcmp.ge.s32.totalorder %v258, 1
        %v358 = vsel %vm356, 1, 0
        %v359 = vsel %vm357, 1, 0
        %v360 = vcvt.s32.f32 %v358
        %v361 = vcvt.s32.f32 %v359
        %v362 = vmul.f32 %v348, %v354
        %v363 = vmul.f32 %v349, %v355
        %v364 = vlog2.pop %v340
        %v365 = vmul.f32 %v364, 0.6931472
        %v366 = vlog2.pop %v341
        %v367 = vmul.f32 %v366, 0.6931472
        %v368 = vsub.f32 %v274, %v346
        %v369 = vsub.f32 %v275, %v347
        %v370 = vadd.f32 %v365, %v368
        %v371 = vadd.f32 %v367, %v369
        %v372 = vmul.f32 %v362, %v360
        %v373 = vmul.f32 %v363, %v361
        %v374 = vmul.f32 %v342, %v354
        %v375 = vmul.f32 %v343, %v355
        %v376 = vmul.f32 %v352, %v370
        %v377 = vmul.f32 %v353, %v371
        %v378 = vld [vmem:[%s241] sm:$0xff]
        %v379 = vadd.f32 %v372, %v373
        %v380 = vadd.f32 %v378, %v379
        %381 = vst [vmem:[%s241] sm:$0xff] %v380
        %s382 = scalar_lea.vmem %s241, 8 [#allocation9]
        %v383 = vld [vmem:[%s382] sm:$0xff]
        %v384 = vadd.f32 %v374, %v375
        %v385 = vadd.f32 %v383, %v384
        %386 = vst [vmem:[%s382] sm:$0xff] %v385
        %s387 = scalar_lea.vmem %s241, 16 [#allocation9]
        %v388 = vld [vmem:[%s387] sm:$0xff]
        %v389 = vadd.f32 %v360, %v361
        %v390 = vadd.f32 %v388, %v389
        %391 = vst [vmem:[%s387] sm:$0xff] %v390
        %s392 = scalar_lea.vmem %s241, 24 [#allocation9]
        %v393 = vld [vmem:[%s392] sm:$0xff]
        %v394 = vadd.f32 %v376, %v377
        %v395 = vadd.f32 %v393, %v394
        %396 = vst [vmem:[%s392] sm:$0xff] %v395
        %s397 = scalar_lea.vmem %s241, 32 [#allocation9]
        %v398 = vld [vmem:[%s397] sm:$0xff]
        %v399 = vadd.f32 %v352, %v353
        %v400 = vadd.f32 %v398, %v399
        %401 = vst [vmem:[%s397] sm:$0xff] %v400
        %s402 = sand.u32 %s116, 1
        %s403 = scalar_lea.sflag [#allocation6], %s402
        %s404 = sand.u32 %s116, 1
        %s405 = smul.addr %s404, 40
        %s406 = scalar_lea.vmem [#allocation9], %s405
        // Predicated region
        $region41: #{tpu_custom_call.1} parent=27 // pred_check
          %p407 = pneg %p126
        $region42: #{tpu_custom_call.1} parent=27 // pred_check_branch
          %409 = sbr.rel (%p407) target = $region44
        $region43: #{tpu_custom_call.1} parent=27 // pred_region
          %s410 = sadd.s32 %s32, %s33
          %s411 = smul.u32 5, %s410
          %s413 = ssub.s32 640, 640
          %414 = vsyncadd %s403, %s413
          %s415 = smul.addr %s411, 128
          %s416 = scalar_lea.hbm %s3, %s415
          %s417 = sshll.u32 %s406, 4
          %s418 = int_to_ptr.vmem [resolvable:$true] %s417
          %423 = dma.vmem_to_hbm [thread:$0]  %s418, 640, %s416, %s403, 128, 128, 8
        $region44: #{tpu_custom_call.1} parent=27 // pred_fallthru
          _
      $region28: #{tpu_custom_call.1} parent=5 // pred_fallthru
        _
      %p424 = scmp.le.s32.totalorder 2, %s22
      // Predicated region
      $region45: #{tpu_custom_call.1} parent=5 // pred_check
        %p425 = pneg %p424
      $region46: #{tpu_custom_call.1} parent=5 // pred_check_branch
        %427 = sbr.rel (%p425) target = $region48
      $region47: #{tpu_custom_call.1} parent=5 // pred_region
        %s428 = ssub.s32 %s22, 2
        // Predicated region
        $region49: #{tpu_custom_call.1} parent=47 // pred_check
          %p429 = pneg %p132
        $region50: #{tpu_custom_call.1} parent=47 // pred_check_branch
          %431 = sbr.rel (%p429) target = $region52
        $region51: #{tpu_custom_call.1} parent=47 // pred_region
          %s432 = sand.u32 %s117, 1
          %s433 = scalar_lea.sflag [#allocation6], %s432
          %s434 = sand.u32 %s117, 1
          %s435 = smul.addr %s434, 40
          %s436 = scalar_lea.vmem [#allocation9], %s435
          %437 = dma.done %s433, 640
        $region52: #{tpu_custom_call.1} parent=47 // pred_fallthru
          _
      $region48: #{tpu_custom_call.1} parent=5 // pred_fallthru
        _
    $region6: #{tpu_custom_call.1} parent=1 // loop_footer
      %s26 = sadd.s32 1, %s22
    $region7: #{tpu_custom_call.1} parent=1 // loop_footer_branch
      %21 = sbr.rel target = $region3
    $region8: #{tpu_custom_call.1} parent=1 // loop_exit
      _
    %438 = vsyncpa [#allocation5], 1
    %s439 = scalar_lea.sflag [#allocation5], 1
    %440 = vsyncpa %s439, 1
    %441 = vsyncpa [#allocation8], 1
    %s442 = scalar_lea.sflag [#allocation8], 1
    %443 = vsyncpa %s442, 1
    %444 = vsyncpa [#allocation6], 1
    %s445 = scalar_lea.sflag [#allocation6], 1
    %446 = vsyncpa %s445, 1

</llo_original>
